<compile_context>
chip_gen: v7x
topology: tpu7x:2x2x1
jax: 0.10.0
libtpu: 0.0.40
codegen_flags: <defaults>
</compile_context>

<pallas_src>
import functools

import jax
import jax.numpy as jnp
from jax.experimental import pallas as pl
from jax.experimental.pallas import tpu as pltpu


# ----------------------------------------------------------------------------
# Pallas kernel: weighted-Jaccard similarity tile
# ----------------------------------------------------------------------------
def _jaccard_kernel(q_ref, et_ref, qsum_ref, esum_ref, sim_ref):
    # q_ref   : (S_pad, D)   full (padded) query batch, resident across grid
    # et_ref  : (D, TE)      entity tile, entities on the lane (fast) axis
    # qsum_ref: (S_pad, 1)   rowsum(q)
    # esum_ref: (1, TE)      rowsum(entity tile)
    # sim_ref : (S_pad, TE)  output tile (lane-dense)
    S, D = q_ref.shape
    TE = et_ref.shape[1]

    # B[s, e] = sum_d |q[s, d] - E[e, d]|, accumulated into a lane-dense
    # (S, TE) f32 buffer.  One (1, TE) entity row is read per d: the full
    # (D, TE) tile is never held in vregs (a D=32, TE=2048 tile would be the
    # entire 64-vreg register file and force spills).
    # TODO(synk): for very large D switch to lax.fori_loop(unroll=4..8) and a
    # pre-lane-replicated query to bound code size / remove per-d lane splats.
    b = jnp.zeros((S, TE), jnp.float32)
    for d in range(D):                          # D is small and static here
        qd = q_ref[:, d:d + 1]                  # (S, 1)  static lane slice
        ed = et_ref[d:d + 1, :]                 # (1, TE) sublane-row load
        b = b + jnp.abs(qd - ed)                # pure VPU: sub + abs + add

    a = qsum_ref[...] + esum_ref[...]           # (S,1)+(1,TE) -> (S,TE)
    # intersection = (A-B)/2, union = (A+B)/2  =>  sim = (A-B)/(A+B).
    denom = jnp.maximum(a + b, 1e-12)           # guard all-zero rows (no NaN)
    # Approx reciprocal runs on the idle EUP; one Newton step restores ~1e-7
    # relative error (well inside the 1e-5 reference tolerance).
    r = pl.reciprocal(denom, approx=True)
    r = r * (2.0 - denom * r)
    sim_ref[...] = (a - b) * r


# ----------------------------------------------------------------------------
# Tile / VMEM sizing helpers (generation-aware)
# ----------------------------------------------------------------------------
def _vmem_budget_bytes() -> int:
    """Per-core VMEM budget with pipelining headroom (v7x=64MiB, v5e/v6e=128MiB)."""
    cap = None
    try:
        info = pltpu.get_tpu_info()
        cap = getattr(info, "vmem_capacity_bytes", None)
    except Exception:
        cap = None
    if not cap:
        cap = 64 * 1024 * 1024          # conservative fallback (v7x per-core)
    return int(max(16 * 1024 * 1024, min(cap // 2, 96 * 1024 * 1024)))


def _choose_tile_e(E_pad: int, D: int, S_pad: int, vmem_budget: int) -> int:
    """Largest lane-dense tile with: accumulator in the 4-32 vreg band,
    >= 4 grid steps when E allows (>= 2 per TensorCore on v7x megacore),
    and double-buffered tiles fitting the per-generation VMEM budget."""
    min_steps = min(4, max(1, E_pad // 128))
    for t in (8192, 4096, 2048, 1024, 512, 256, 128):
        if E_pad % t != 0:
            continue
        if t > 128:
            if S_pad * t > 32 * 1024:                       # acc <= 32 vregs
                continue
            if E_pad // t < min_steps:                      # keep pipelining
                continue
            # 2x-buffered entity / rowsum / output tiles + resident query.
            vmem = 4 * (2 * (D * t + t + S_pad * t) + S_pad * (D + 1))
            if vmem > vmem_budget:
                continue
        return t
    return 128


def _entity_pad_granularity(E: int) -> int:
    if E >= 16384:
        return 4096
    if E >= 1024:
        return 1024
    return 128


def prepare_entity_table(entity_info: jax.Array):
    """Done ONCE at init (static table): flatten, zero-pad E to a tile-friendly
    multiple, pre-transpose to (D, E_pad) so entities sit on the lane axis, and
    precompute per-entity row sums."""
    E = int(entity_info.shape[0])
    e_flat = jnp.asarray(entity_info, jnp.float32).reshape(E, -1)
    gran = _entity_pad_granularity(E)
    E_pad = ((E + gran - 1) // gran) * gran
    if E_pad != E:
        e_flat = jnp.pad(e_flat, ((0, E_pad - E), (0, 0)))   # zero rows
    entity_t = jnp.asarray(e_flat.T)                          # (D, E_pad)
    entity_rowsum = jnp.sum(e_flat, axis=1)[None, :]          # (1, E_pad)
    return entity_t, entity_rowsum, E


# ----------------------------------------------------------------------------
# Pallas wrapper
# ----------------------------------------------------------------------------
def _jaccard_pallas(query_flat: jax.Array, entity_t: jax.Array,
                    entity_rowsum: jax.Array) -> jax.Array:
    """query_flat: (S, D); entity_t: (D, E_pad); entity_rowsum: (1, E_pad)
    -> (S, E_pad) weighted-Jaccard similarity."""
    S, D = query_flat.shape
    D2, E_pad = entity_t.shape
    assert D == D2

    # Pad the sample axis to a sublane multiple; padded rows give sim == 0
    # (denominator stays > 0 thanks to the eps guard) and are sliced off.
    S_pad = ((S + 7) // 8) * 8
    q = query_flat.astype(jnp.float32)
    if S_pad != S:
        q = jnp.pad(q, ((0, S_pad - S), (0, 0)))
    qsum = jnp.sum(q, axis=1, keepdims=True)                  # (S_pad, 1)

    budget = _vmem_budget_bytes()
    tile_e = _choose_tile_e(E_pad, D, S_pad, budget)
    # TODO(synk): on v5e add pipeline_mode=pl.Buffered(3) to the entity spec to
    # deepen the input pipeline (slowest-HBM generation).

    sim_padded = pl.pallas_call(
        _jaccard_kernel,
        out_shape=jax.ShapeDtypeStruct((S_pad, E_pad), jnp.float32),
        grid=(E_pad // tile_e,),
        in_specs=[
            pl.BlockSpec((S_pad, D), lambda j: (0, 0)),       # query (resident)
            pl.BlockSpec((D, tile_e), lambda j: (0, j)),      # entity tile j
            pl.BlockSpec((S_pad, 1), lambda j: (0, 0)),       # query rowsums
            pl.BlockSpec((1, tile_e), lambda j: (0, j)),      # entity rowsums
        ],
        out_specs=pl.BlockSpec((S_pad, tile_e), lambda j: (0, j)),
        compiler_params=pltpu.CompilerParams(
            dimension_semantics=("parallel",),
            vmem_limit_bytes=budget,
        ),
    )(q, entity_t, qsum, entity_rowsum)
    return sim_padded[:S]


# ----------------------------------------------------------------------------
# Similarity + top-k / bottom-k (jitted free function; `self` never traced)
# ----------------------------------------------------------------------------
@functools.partial(jax.jit, static_argnums=(3, 4))
def _sim_and_topk(query, entity_t, entity_rowsum, n_entities, k):
    S = query.shape[0]
    q_flat = query.reshape(S, -1).astype(jnp.float32)
    sim_pad = _jaccard_pallas(q_flat, entity_t, entity_rowsum)
    sim = sim_pad[:, :n_entities]            # drop zero-padded entity columns
    # Single ascending argsort: both ends in one pass, no negated (S, E) copy.
    # TODO(synk): for very large E, stream per-tile top-k/bottom-k candidates
    # out of the Pallas kernel and merge k*num_tiles candidates here to avoid
    # the full (S, E) HBM writeback + re-read.
    order = jnp.argsort(sim, axis=1)
    bot_k_idx = order[:, :k]                          # smallest, ascending
    top_k_idx = jnp.flip(order[:, -k:], axis=1)       # largest, descending
    return top_k_idx, bot_k_idx, sim


# ----------------------------------------------------------------------------
# interval_emb = ReLU(x @ W + b) — plain JAX (too small/lane-sparse for Pallas)
# ----------------------------------------------------------------------------
def interval_emb(x: jax.Array, w: jax.Array, b: jax.Array) -> jax.Array:
    return jnp.maximum(x @ w + b, 0.0)


# ----------------------------------------------------------------------------
# KGEM module (JAX / Pallas)
# ----------------------------------------------------------------------------
class KGEM:
    def __init__(self, sizes, emb_size, entity_info, T_emb_size, key):
        table_sizes = [sizes[0], sizes[1], sizes[3], sizes[0],
                       sizes[0], sizes[0], sizes[3]]
        keys = jax.random.split(key, len(table_sizes) + 4)
        self.embeddings = [
            jax.random.normal(keys[i], (s, emb_size), jnp.float32)
            for i, s in enumerate(table_sizes)
        ]
        self.week_emb = jax.random.normal(keys[-4], (7, T_emb_size), jnp.float32)
        self.month_emb = jax.random.normal(keys[-3], (31, T_emb_size), jnp.float32)
        # interval_emb = Linear(1, T_emb_size) + ReLU
        self.interval_w = jax.random.normal(keys[-2], (1, T_emb_size), jnp.float32)
        self.interval_b = jax.random.normal(keys[-1], (T_emb_size,), jnp.float32)
        # entity_info: (n_entities, n_time_dim, n_features), nonnegative.
        self.entity_info = jnp.asarray(entity_info, jnp.float32)
        # Hoisted out of the per-call jit (static table): transpose to the
        # lane axis, zero-pad E to a tile multiple, precompute row sums.
        self.entity_t, self.entity_rowsum, self.n_entities = (
            prepare_entity_table(self.entity_info))

    def forward(self, x):
        # TODO(synk): original PyTorch forward() is `pass` — nothing to implement.
        return None

    def similarityByJaccard(self, query, k):
        top_idx, bot_idx, _ = _sim_and_topk(
            query, self.entity_t, self.entity_rowsum, self.n_entities, int(k))
        return top_idx, bot_idx


if __name__ == "__main__":
    key = jax.random.PRNGKey(0)
    k_ent, k_query, k_interval, k_model = jax.random.split(key, 4)

    # Small, self-consistent shapes.  n_entities is deliberately NOT a
    # multiple of 128 to exercise the zero-padding path.
    sizes = (16, 8, 6, 10)
    emb_size = 32
    T_emb_size = 16
    n_entities = 300
    n_samples = 2
    n_time_dim = 8
    n_features = 4
    k = 3

    # Nonnegative entity info / query so the Jaccard union is strictly positive.
    entity_info = jax.random.uniform(
        k_ent, (n_entities, n_time_dim, n_features), jnp.float32, 0.1, 1.0)
    query = jax.random.uniform(
        k_query, (n_samples, n_time_dim, n_features), jnp.float32, 0.1, 1.0)

    model = KGEM(sizes, emb_size, entity_info, T_emb_size, k_model)

    # Hot path: weighted-Jaccard similarity + top-k / bottom-k indices.
    top_idx, bot_idx, sim = _sim_and_topk(
        query, model.entity_t, model.entity_rowsum, model.n_entities, k)
    jax.block_until_ready((top_idx, bot_idx, sim))

    # Public API path as well.
    t_idx2, b_idx2 = model.similarityByJaccard(query, k)
    jax.block_until_ready((t_idx2, b_idx2))

    # Sanity check against a pure-JAX reference (original min/max formulation).
    q_flat = query.reshape(n_samples, -1)
    e_flat = entity_info.reshape(n_entities, -1)
    inter_ref = jnp.sum(jnp.minimum(q_flat[:, None, :], e_flat[None, :, :]), axis=2)
    union_ref = jnp.sum(jnp.maximum(q_flat[:, None, :], e_flat[None, :, :]), axis=2)
    sim_ref = inter_ref / union_ref
    assert sim.shape == (n_samples, n_entities)
    assert jnp.allclose(sim, sim_ref, atol=1e-5, rtol=1e-5)
    assert jnp.array_equal(top_idx, t_idx2)
    assert jnp.array_equal(bot_idx, b_idx2)

    # Selected values must match the k largest / smallest of the reference.
    top_vals = jnp.take_along_axis(sim_ref, top_idx, axis=1)
    bot_vals = jnp.take_along_axis(sim_ref, bot_idx, axis=1)
    sorted_ref = jnp.sort(sim_ref, axis=1)
    assert jnp.allclose(top_vals, jnp.flip(sorted_ref[:, -k:], axis=1),
                        atol=1e-5, rtol=1e-5)
    assert jnp.allclose(bot_vals, sorted_ref[:, :k], atol=1e-5, rtol=1e-5)

    # Auxiliary interval embedding (Linear(1,T) + ReLU), plain JAX.
    intervals = jax.random.uniform(k_interval, (8, 1), jnp.float32)
    iv = interval_emb(intervals, model.interval_w, model.interval_b)
    jax.block_until_ready(iv)
    iv_ref = jnp.maximum(intervals @ model.interval_w + model.interval_b, 0.0)
    assert jnp.allclose(iv, iv_ref, atol=1e-5, rtol=1e-5)

    # Deterministic embedding lookups (plain JAX gather glue).
    ent_ids = jnp.array([0, 3], dtype=jnp.int32)
    _ = jax.block_until_ready(model.embeddings[0][ent_ids])
    _ = jax.block_until_ready(model.week_emb[jnp.array([1, 5])])
    _ = jax.block_until_ready(model.month_emb[jnp.array([0, 30])])

    print("KERNEL_OK")
</pallas_src>

<mosaic_0001>
module attributes {stable_mosaic.version = 11 : i64} {
  func.func @_jaccard_kernel(%arg0: i32, %arg1: memref<8x32xf32, #tpu.memory_space<vmem>>, %arg2: memref<32x128xf32, #tpu.memory_space<vmem>>, %arg3: memref<8x1xf32, #tpu.memory_space<vmem>>, %arg4: memref<1x128xf32, #tpu.memory_space<vmem>>, %arg5: memref<8x128xf32, #tpu.memory_space<vmem>>) attributes {dimension_semantics = [#tpu.dimension_semantics<parallel>], iteration_bounds = array<i64: 3>, scalar_prefetch = 0 : i64, scratch_operands = 0 : i64, tpu.core_type = #tpu.core_type<tc>, window_params = [{pipeline_mode = #tpu.pipeline_mode<synchronous>, transform_indices = @transform_0, window_bounds = array<i64: 8, 32>}, {transform_indices = @transform_1, window_bounds = array<i64: 32, 128>}, {pipeline_mode = #tpu.pipeline_mode<synchronous>, transform_indices = @transform_2, window_bounds = array<i64: 8, 1>}, {transform_indices = @transform_3, window_bounds = array<i64: 1, 128>}, {transform_indices = @transform_4, window_bounds = array<i64: 8, 128>}]} {
    %cst = arith.constant 0.000000e+00 : f32
    %0 = vector.broadcast %cst : f32 to vector<8x128xf32>
    %c0 = arith.constant 0 : index
    %c0_0 = arith.constant 0 : index
    %1 = vector.load %arg1[%c0, %c0_0] : memref<8x32xf32, #tpu.memory_space<vmem>>, vector<8x1xf32>
    %c0_1 = arith.constant 0 : index
    %c0_2 = arith.constant 0 : index
    %2 = vector.load %arg2[%c0_1, %c0_2] : memref<32x128xf32, #tpu.memory_space<vmem>>, vector<1x128xf32>
    %3 = vector.broadcast %1 : vector<8x1xf32> to vector<8x128xf32>
    %4 = vector.broadcast %2 : vector<1x128xf32> to vector<8x128xf32>
    %5 = arith.subf %3, %4 : vector<8x128xf32>
    %6 = math.absf %5 : vector<8x128xf32>
    %7 = arith.addf %0, %6 : vector<8x128xf32>
    %c0_3 = arith.constant 0 : index
    %c1 = arith.constant 1 : index
    %8 = vector.load %arg1[%c0_3, %c1] : memref<8x32xf32, #tpu.memory_space<vmem>>, vector<8x1xf32>
    %c1_4 = arith.constant 1 : index
    %c0_5 = arith.constant 0 : index
    %9 = vector.load %arg2[%c1_4, %c0_5] : memref<32x128xf32, #tpu.memory_space<vmem>>, vector<1x128xf32>
    %10 = vector.broadcast %8 : vector<8x1xf32> to vector<8x128xf32>
    %11 = vector.broadcast %9 : vector<1x128xf32> to vector<8x128xf32>
    %12 = arith.subf %10, %11 : vector<8x128xf32>
    %13 = math.absf %12 : vector<8x128xf32>
    %14 = arith.addf %7, %13 : vector<8x128xf32>
    %c0_6 = arith.constant 0 : index
    %c2 = arith.constant 2 : index
    %15 = vector.load %arg1[%c0_6, %c2] : memref<8x32xf32, #tpu.memory_space<vmem>>, vector<8x1xf32>
    %c2_7 = arith.constant 2 : index
    %c0_8 = arith.constant 0 : index
    %16 = vector.load %arg2[%c2_7, %c0_8] : memref<32x128xf32, #tpu.memory_space<vmem>>, vector<1x128xf32>
    %17 = vector.broadcast %15 : vector<8x1xf32> to vector<8x128xf32>
    %18 = vector.broadcast %16 : vector<1x128xf32> to vector<8x128xf32>
    %19 = arith.subf %17, %18 : vector<8x128xf32>
    %20 = math.absf %19 : vector<8x128xf32>
    %21 = arith.addf %14, %20 : vector<8x128xf32>
    %c0_9 = arith.constant 0 : index
    %c3 = arith.constant 3 : index
    %22 = vector.load %arg1[%c0_9, %c3] : memref<8x32xf32, #tpu.memory_space<vmem>>, vector<8x1xf32>
    %c3_10 = arith.constant 3 : index
    %c0_11 = arith.constant 0 : index
    %23 = vector.load %arg2[%c3_10, %c0_11] : memref<32x128xf32, #tpu.memory_space<vmem>>, vector<1x128xf32>
    %24 = vector.broadcast %22 : vector<8x1xf32> to vector<8x128xf32>
    %25 = vector.broadcast %23 : vector<1x128xf32> to vector<8x128xf32>
    %26 = arith.subf %24, %25 : vector<8x128xf32>
    %27 = math.absf %26 : vector<8x128xf32>
    %28 = arith.addf %21, %27 : vector<8x128xf32>
    %c0_12 = arith.constant 0 : index
    %c4 = arith.constant 4 : index
    %29 = vector.load %arg1[%c0_12, %c4] : memref<8x32xf32, #tpu.memory_space<vmem>>, vector<8x1xf32>
    %c4_13 = arith.constant 4 : index
    %c0_14 = arith.constant 0 : index
    %30 = vector.load %arg2[%c4_13, %c0_14] : memref<32x128xf32, #tpu.memory_space<vmem>>, vector<1x128xf32>
    %31 = vector.broadcast %29 : vector<8x1xf32> to vector<8x128xf32>
    %32 = vector.broadcast %30 : vector<1x128xf32> to vector<8x128xf32>
    %33 = arith.subf %31, %32 : vector<8x128xf32>
    %34 = math.absf %33 : vector<8x128xf32>
    %35 = arith.addf %28, %34 : vector<8x128xf32>
    %c0_15 = arith.constant 0 : index
    %c5 = arith.constant 5 : index
    %36 = vector.load %arg1[%c0_15, %c5] : memref<8x32xf32, #tpu.memory_space<vmem>>, vector<8x1xf32>
    %c5_16 = arith.constant 5 : index
    %c0_17 = arith.constant 0 : index
    %37 = vector.load %arg2[%c5_16, %c0_17] : memref<32x128xf32, #tpu.memory_space<vmem>>, vector<1x128xf32>
    %38 = vector.broadcast %36 : vector<8x1xf32> to vector<8x128xf32>
    %39 = vector.broadcast %37 : vector<1x128xf32> to vector<8x128xf32>
    %40 = arith.subf %38, %39 : vector<8x128xf32>
    %41 = math.absf %40 : vector<8x128xf32>
    %42 = arith.addf %35, %41 : vector<8x128xf32>
    %c0_18 = arith.constant 0 : index
    %c6 = arith.constant 6 : index
    %43 = vector.load %arg1[%c0_18, %c6] : memref<8x32xf32, #tpu.memory_space<vmem>>, vector<8x1xf32>
    %c6_19 = arith.constant 6 : index
    %c0_20 = arith.constant 0 : index
    %44 = vector.load %arg2[%c6_19, %c0_20] : memref<32x128xf32, #tpu.memory_space<vmem>>, vector<1x128xf32>
    %45 = vector.broadcast %43 : vector<8x1xf32> to vector<8x128xf32>
    %46 = vector.broadcast %44 : vector<1x128xf32> to vector<8x128xf32>
    %47 = arith.subf %45, %46 : vector<8x128xf32>
    %48 = math.absf %47 : vector<8x128xf32>
    %49 = arith.addf %42, %48 : vector<8x128xf32>
    %c0_21 = arith.constant 0 : index
    %c7 = arith.constant 7 : index
    %50 = vector.load %arg1[%c0_21, %c7] : memref<8x32xf32, #tpu.memory_space<vmem>>, vector<8x1xf32>
    %c7_22 = arith.constant 7 : index
    %c0_23 = arith.constant 0 : index
    %51 = vector.load %arg2[%c7_22, %c0_23] : memref<32x128xf32, #tpu.memory_space<vmem>>, vector<1x128xf32>
    %52 = vector.broadcast %50 : vector<8x1xf32> to vector<8x128xf32>
    %53 = vector.broadcast %51 : vector<1x128xf32> to vector<8x128xf32>
    %54 = arith.subf %52, %53 : vector<8x128xf32>
    %55 = math.absf %54 : vector<8x128xf32>
    %56 = arith.addf %49, %55 : vector<8x128xf32>
    %c0_24 = arith.constant 0 : index
    %c8 = arith.constant 8 : index
    %57 = vector.load %arg1[%c0_24, %c8] : memref<8x32xf32, #tpu.memory_space<vmem>>, vector<8x1xf32>
    %c8_25 = arith.constant 8 : index
    %c0_26 = arith.constant 0 : index
    %58 = vector.load %arg2[%c8_25, %c0_26] : memref<32x128xf32, #tpu.memory_space<vmem>>, vector<1x128xf32>
    %59 = vector.broadcast %57 : vector<8x1xf32> to vector<8x128xf32>
    %60 = vector.broadcast %58 : vector<1x128xf32> to vector<8x128xf32>
    %61 = arith.subf %59, %60 : vector<8x128xf32>
    %62 = math.absf %61 : vector<8x128xf32>
    %63 = arith.addf %56, %62 : vector<8x128xf32>
    %c0_27 = arith.constant 0 : index
    %c9 = arith.constant 9 : index
    %64 = vector.load %arg1[%c0_27, %c9] : memref<8x32xf32, #tpu.memory_space<vmem>>, vector<8x1xf32>
    %c9_28 = arith.constant 9 : index
    %c0_29 = arith.constant 0 : index
    %65 = vector.load %arg2[%c9_28, %c0_29] : memref<32x128xf32, #tpu.memory_space<vmem>>, vector<1x128xf32>
    %66 = vector.broadcast %64 : vector<8x1xf32> to vector<8x128xf32>
    %67 = vector.broadcast %65 : vector<1x128xf32> to vector<8x128xf32>
    %68 = arith.subf %66, %67 : vector<8x128xf32>
    %69 = math.absf %68 : vector<8x128xf32>
    %70 = arith.addf %63, %69 : vector<8x128xf32>
    %c0_30 = arith.constant 0 : index
    %c10 = arith.constant 10 : index
    %71 = vector.load %arg1[%c0_30, %c10] : memref<8x32xf32, #tpu.memory_space<vmem>>, vector<8x1xf32>
    %c10_31 = arith.constant 10 : index
    %c0_32 = arith.constant 0 : index
    %72 = vector.load %arg2[%c10_31, %c0_32] : memref<32x128xf32, #tpu.memory_space<vmem>>, vector<1x128xf32>
    %73 = vector.broadcast %71 : vector<8x1xf32> to vector<8x128xf32>
    %74 = vector.broadcast %72 : vector<1x128xf32> to vector<8x128xf32>
    %75 = arith.subf %73, %74 : vector<8x128xf32>
    %76 = math.absf %75 : vector<8x128xf32>
    %77 = arith.addf %70, %76 : vector<8x128xf32>
    %c0_33 = arith.constant 0 : index
    %c11 = arith.constant 11 : index
    %78 = vector.load %arg1[%c0_33, %c11] : memref<8x32xf32, #tpu.memory_space<vmem>>, vector<8x1xf32>
    %c11_34 = arith.constant 11 : index
    %c0_35 = arith.constant 0 : index
    %79 = vector.load %arg2[%c11_34, %c0_35] : memref<32x128xf32, #tpu.memory_space<vmem>>, vector<1x128xf32>
    %80 = vector.broadcast %78 : vector<8x1xf32> to vector<8x128xf32>
    %81 = vector.broadcast %79 : vector<1x128xf32> to vector<8x128xf32>
    %82 = arith.subf %80, %81 : vector<8x128xf32>
    %83 = math.absf %82 : vector<8x128xf32>
    %84 = arith.addf %77, %83 : vector<8x128xf32>
    %c0_36 = arith.constant 0 : index
    %c12 = arith.constant 12 : index
    %85 = vector.load %arg1[%c0_36, %c12] : memref<8x32xf32, #tpu.memory_space<vmem>>, vector<8x1xf32>
    %c12_37 = arith.constant 12 : index
    %c0_38 = arith.constant 0 : index
    %86 = vector.load %arg2[%c12_37, %c0_38] : memref<32x128xf32, #tpu.memory_space<vmem>>, vector<1x128xf32>
    %87 = vector.broadcast %85 : vector<8x1xf32> to vector<8x128xf32>
    %88 = vector.broadcast %86 : vector<1x128xf32> to vector<8x128xf32>
    %89 = arith.subf %87, %88 : vector<8x128xf32>
    %90 = math.absf %89 : vector<8x128xf32>
    %91 = arith.addf %84, %90 : vector<8x128xf32>
    %c0_39 = arith.constant 0 : index
    %c13 = arith.constant 13 : index
    %92 = vector.load %arg1[%c0_39, %c13] : memref<8x32xf32, #tpu.memory_space<vmem>>, vector<8x1xf32>
    %c13_40 = arith.constant 13 : index
    %c0_41 = arith.constant 0 : index
    %93 = vector.load %arg2[%c13_40, %c0_41] : memref<32x128xf32, #tpu.memory_space<vmem>>, vector<1x128xf32>
    %94 = vector.broadcast %92 : vector<8x1xf32> to vector<8x128xf32>
    %95 = vector.broadcast %93 : vector<1x128xf32> to vector<8x128xf32>
    %96 = arith.subf %94, %95 : vector<8x128xf32>
    %97 = math.absf %96 : vector<8x128xf32>
    %98 = arith.addf %91, %97 : vector<8x128xf32>
    %c0_42 = arith.constant 0 : index
    %c14 = arith.constant 14 : index
    %99 = vector.load %arg1[%c0_42, %c14] : memref<8x32xf32, #tpu.memory_space<vmem>>, vector<8x1xf32>
    %c14_43 = arith.constant 14 : index
    %c0_44 = arith.constant 0 : index
    %100 = vector.load %arg2[%c14_43, %c0_44] : memref<32x128xf32, #tpu.memory_space<vmem>>, vector<1x128xf32>
    %101 = vector.broadcast %99 : vector<8x1xf32> to vector<8x128xf32>
    %102 = vector.broadcast %100 : vector<1x128xf32> to vector<8x128xf32>
    %103 = arith.subf %101, %102 : vector<8x128xf32>
    %104 = math.absf %103 : vector<8x128xf32>
    %105 = arith.addf %98, %104 : vector<8x128xf32>
    %c0_45 = arith.constant 0 : index
    %c15 = arith.constant 15 : index
    %106 = vector.load %arg1[%c0_45, %c15] : memref<8x32xf32, #tpu.memory_space<vmem>>, vector<8x1xf32>
    %c15_46 = arith.constant 15 : index
    %c0_47 = arith.constant 0 : index
    %107 = vector.load %arg2[%c15_46, %c0_47] : memref<32x128xf32, #tpu.memory_space<vmem>>, vector<1x128xf32>
    %108 = vector.broadcast %106 : vector<8x1xf32> to vector<8x128xf32>
    %109 = vector.broadcast %107 : vector<1x128xf32> to vector<8x128xf32>
    %110 = arith.subf %108, %109 : vector<8x128xf32>
    %111 = math.absf %110 : vector<8x128xf32>
    %112 = arith.addf %105, %111 : vector<8x128xf32>
    %c0_48 = arith.constant 0 : index
    %c16 = arith.constant 16 : index
    %113 = vector.load %arg1[%c0_48, %c16] : memref<8x32xf32, #tpu.memory_space<vmem>>, vector<8x1xf32>
    %c16_49 = arith.constant 16 : index
    %c0_50 = arith.constant 0 : index
    %114 = vector.load %arg2[%c16_49, %c0_50] : memref<32x128xf32, #tpu.memory_space<vmem>>, vector<1x128xf32>
    %115 = vector.broadcast %113 : vector<8x1xf32> to vector<8x128xf32>
    %116 = vector.broadcast %114 : vector<1x128xf32> to vector<8x128xf32>
    %117 = arith.subf %115, %116 : vector<8x128xf32>
    %118 = math.absf %117 : vector<8x128xf32>
    %119 = arith.addf %112, %118 : vector<8x128xf32>
    %c0_51 = arith.constant 0 : index
    %c17 = arith.constant 17 : index
    %120 = vector.load %arg1[%c0_51, %c17] : memref<8x32xf32, #tpu.memory_space<vmem>>, vector<8x1xf32>
    %c17_52 = arith.constant 17 : index
    %c0_53 = arith.constant 0 : index
    %121 = vector.load %arg2[%c17_52, %c0_53] : memref<32x128xf32, #tpu.memory_space<vmem>>, vector<1x128xf32>
    %122 = vector.broadcast %120 : vector<8x1xf32> to vector<8x128xf32>
    %123 = vector.broadcast %121 : vector<1x128xf32> to vector<8x128xf32>
    %124 = arith.subf %122, %123 : vector<8x128xf32>
    %125 = math.absf %124 : vector<8x128xf32>
    %126 = arith.addf %119, %125 : vector<8x128xf32>
    %c0_54 = arith.constant 0 : index
    %c18 = arith.constant 18 : index
    %127 = vector.load %arg1[%c0_54, %c18] : memref<8x32xf32, #tpu.memory_space<vmem>>, vector<8x1xf32>
    %c18_55 = arith.constant 18 : index
    %c0_56 = arith.constant 0 : index
    %128 = vector.load %arg2[%c18_55, %c0_56] : memref<32x128xf32, #tpu.memory_space<vmem>>, vector<1x128xf32>
    %129 = vector.broadcast %127 : vector<8x1xf32> to vector<8x128xf32>
    %130 = vector.broadcast %128 : vector<1x128xf32> to vector<8x128xf32>
    %131 = arith.subf %129, %130 : vector<8x128xf32>
    %132 = math.absf %131 : vector<8x128xf32>
    %133 = arith.addf %126, %132 : vector<8x128xf32>
    %c0_57 = arith.constant 0 : index
    %c19 = arith.constant 19 : index
    %134 = vector.load %arg1[%c0_57, %c19] : memref<8x32xf32, #tpu.memory_space<vmem>>, vector<8x1xf32>
    %c19_58 = arith.constant 19 : index
    %c0_59 = arith.constant 0 : index
    %135 = vector.load %arg2[%c19_58, %c0_59] : memref<32x128xf32, #tpu.memory_space<vmem>>, vector<1x128xf32>
    %136 = vector.broadcast %134 : vector<8x1xf32> to vector<8x128xf32>
    %137 = vector.broadcast %135 : vector<1x128xf32> to vector<8x128xf32>
    %138 = arith.subf %136, %137 : vector<8x128xf32>
    %139 = math.absf %138 : vector<8x128xf32>
    %140 = arith.addf %133, %139 : vector<8x128xf32>
    %c0_60 = arith.constant 0 : index
    %c20 = arith.constant 20 : index
    %141 = vector.load %arg1[%c0_60, %c20] : memref<8x32xf32, #tpu.memory_space<vmem>>, vector<8x1xf32>
    %c20_61 = arith.constant 20 : index
    %c0_62 = arith.constant 0 : index
    %142 = vector.load %arg2[%c20_61, %c0_62] : memref<32x128xf32, #tpu.memory_space<vmem>>, vector<1x128xf32>
    %143 = vector.broadcast %141 : vector<8x1xf32> to vector<8x128xf32>
    %144 = vector.broadcast %142 : vector<1x128xf32> to vector<8x128xf32>
    %145 = arith.subf %143, %144 : vector<8x128xf32>
    %146 = math.absf %145 : vector<8x128xf32>
    %147 = arith.addf %140, %146 : vector<8x128xf32>
    %c0_63 = arith.constant 0 : index
    %c21 = arith.constant 21 : index
    %148 = vector.load %arg1[%c0_63, %c21] : memref<8x32xf32, #tpu.memory_space<vmem>>, vector<8x1xf32>
    %c21_64 = arith.constant 21 : index
    %c0_65 = arith.constant 0 : index
    %149 = vector.load %arg2[%c21_64, %c0_65] : memref<32x128xf32, #tpu.memory_space<vmem>>, vector<1x128xf32>
    %150 = vector.broadcast %148 : vector<8x1xf32> to vector<8x128xf32>
    %151 = vector.broadcast %149 : vector<1x128xf32> to vector<8x128xf32>
    %152 = arith.subf %150, %151 : vector<8x128xf32>
    %153 = math.absf %152 : vector<8x128xf32>
    %154 = arith.addf %147, %153 : vector<8x128xf32>
    %c0_66 = arith.constant 0 : index
    %c22 = arith.constant 22 : index
    %155 = vector.load %arg1[%c0_66, %c22] : memref<8x32xf32, #tpu.memory_space<vmem>>, vector<8x1xf32>
    %c22_67 = arith.constant 22 : index
    %c0_68 = arith.constant 0 : index
    %156 = vector.load %arg2[%c22_67, %c0_68] : memref<32x128xf32, #tpu.memory_space<vmem>>, vector<1x128xf32>
    %157 = vector.broadcast %155 : vector<8x1xf32> to vector<8x128xf32>
    %158 = vector.broadcast %156 : vector<1x128xf32> to vector<8x128xf32>
    %159 = arith.subf %157, %158 : vector<8x128xf32>
    %160 = math.absf %159 : vector<8x128xf32>
    %161 = arith.addf %154, %160 : vector<8x128xf32>
    %c0_69 = arith.constant 0 : index
    %c23 = arith.constant 23 : index
    %162 = vector.load %arg1[%c0_69, %c23] : memref<8x32xf32, #tpu.memory_space<vmem>>, vector<8x1xf32>
    %c23_70 = arith.constant 23 : index
    %c0_71 = arith.constant 0 : index
    %163 = vector.load %arg2[%c23_70, %c0_71] : memref<32x128xf32, #tpu.memory_space<vmem>>, vector<1x128xf32>
    %164 = vector.broadcast %162 : vector<8x1xf32> to vector<8x128xf32>
    %165 = vector.broadcast %163 : vector<1x128xf32> to vector<8x128xf32>
    %166 = arith.subf %164, %165 : vector<8x128xf32>
    %167 = math.absf %166 : vector<8x128xf32>
    %168 = arith.addf %161, %167 : vector<8x128xf32>
    %c0_72 = arith.constant 0 : index
    %c24 = arith.constant 24 : index
    %169 = vector.load %arg1[%c0_72, %c24] : memref<8x32xf32, #tpu.memory_space<vmem>>, vector<8x1xf32>
    %c24_73 = arith.constant 24 : index
    %c0_74 = arith.constant 0 : index
    %170 = vector.load %arg2[%c24_73, %c0_74] : memref<32x128xf32, #tpu.memory_space<vmem>>, vector<1x128xf32>
    %171 = vector.broadcast %169 : vector<8x1xf32> to vector<8x128xf32>
    %172 = vector.broadcast %170 : vector<1x128xf32> to vector<8x128xf32>
    %173 = arith.subf %171, %172 : vector<8x128xf32>
    %174 = math.absf %173 : vector<8x128xf32>
    %175 = arith.addf %168, %174 : vector<8x128xf32>
    %c0_75 = arith.constant 0 : index
    %c25 = arith.constant 25 : index
    %176 = vector.load %arg1[%c0_75, %c25] : memref<8x32xf32, #tpu.memory_space<vmem>>, vector<8x1xf32>
    %c25_76 = arith.constant 25 : index
    %c0_77 = arith.constant 0 : index
    %177 = vector.load %arg2[%c25_76, %c0_77] : memref<32x128xf32, #tpu.memory_space<vmem>>, vector<1x128xf32>
    %178 = vector.broadcast %176 : vector<8x1xf32> to vector<8x128xf32>
    %179 = vector.broadcast %177 : vector<1x128xf32> to vector<8x128xf32>
    %180 = arith.subf %178, %179 : vector<8x128xf32>
    %181 = math.absf %180 : vector<8x128xf32>
    %182 = arith.addf %175, %181 : vector<8x128xf32>
    %c0_78 = arith.constant 0 : index
    %c26 = arith.constant 26 : index
    %183 = vector.load %arg1[%c0_78, %c26] : memref<8x32xf32, #tpu.memory_space<vmem>>, vector<8x1xf32>
    %c26_79 = arith.constant 26 : index
    %c0_80 = arith.constant 0 : index
    %184 = vector.load %arg2[%c26_79, %c0_80] : memref<32x128xf32, #tpu.memory_space<vmem>>, vector<1x128xf32>
    %185 = vector.broadcast %183 : vector<8x1xf32> to vector<8x128xf32>
    %186 = vector.broadcast %184 : vector<1x128xf32> to vector<8x128xf32>
    %187 = arith.subf %185, %186 : vector<8x128xf32>
    %188 = math.absf %187 : vector<8x128xf32>
    %189 = arith.addf %182, %188 : vector<8x128xf32>
    %c0_81 = arith.constant 0 : index
    %c27 = arith.constant 27 : index
    %190 = vector.load %arg1[%c0_81, %c27] : memref<8x32xf32, #tpu.memory_space<vmem>>, vector<8x1xf32>
    %c27_82 = arith.constant 27 : index
    %c0_83 = arith.constant 0 : index
    %191 = vector.load %arg2[%c27_82, %c0_83] : memref<32x128xf32, #tpu.memory_space<vmem>>, vector<1x128xf32>
    %192 = vector.broadcast %190 : vector<8x1xf32> to vector<8x128xf32>
    %193 = vector.broadcast %191 : vector<1x128xf32> to vector<8x128xf32>
    %194 = arith.subf %192, %193 : vector<8x128xf32>
    %195 = math.absf %194 : vector<8x128xf32>
    %196 = arith.addf %189, %195 : vector<8x128xf32>
    %c0_84 = arith.constant 0 : index
    %c28 = arith.constant 28 : index
    %197 = vector.load %arg1[%c0_84, %c28] : memref<8x32xf32, #tpu.memory_space<vmem>>, vector<8x1xf32>
    %c28_85 = arith.constant 28 : index
    %c0_86 = arith.constant 0 : index
    %198 = vector.load %arg2[%c28_85, %c0_86] : memref<32x128xf32, #tpu.memory_space<vmem>>, vector<1x128xf32>
    %199 = vector.broadcast %197 : vector<8x1xf32> to vector<8x128xf32>
    %200 = vector.broadcast %198 : vector<1x128xf32> to vector<8x128xf32>
    %201 = arith.subf %199, %200 : vector<8x128xf32>
    %202 = math.absf %201 : vector<8x128xf32>
    %203 = arith.addf %196, %202 : vector<8x128xf32>
    %c0_87 = arith.constant 0 : index
    %c29 = arith.constant 29 : index
    %204 = vector.load %arg1[%c0_87, %c29] : memref<8x32xf32, #tpu.memory_space<vmem>>, vector<8x1xf32>
    %c29_88 = arith.constant 29 : index
    %c0_89 = arith.constant 0 : index
    %205 = vector.load %arg2[%c29_88, %c0_89] : memref<32x128xf32, #tpu.memory_space<vmem>>, vector<1x128xf32>
    %206 = vector.broadcast %204 : vector<8x1xf32> to vector<8x128xf32>
    %207 = vector.broadcast %205 : vector<1x128xf32> to vector<8x128xf32>
    %208 = arith.subf %206, %207 : vector<8x128xf32>
    %209 = math.absf %208 : vector<8x128xf32>
    %210 = arith.addf %203, %209 : vector<8x128xf32>
    %c0_90 = arith.constant 0 : index
    %c30 = arith.constant 30 : index
    %211 = vector.load %arg1[%c0_90, %c30] : memref<8x32xf32, #tpu.memory_space<vmem>>, vector<8x1xf32>
    %c30_91 = arith.constant 30 : index
    %c0_92 = arith.constant 0 : index
    %212 = vector.load %arg2[%c30_91, %c0_92] : memref<32x128xf32, #tpu.memory_space<vmem>>, vector<1x128xf32>
    %213 = vector.broadcast %211 : vector<8x1xf32> to vector<8x128xf32>
    %214 = vector.broadcast %212 : vector<1x128xf32> to vector<8x128xf32>
    %215 = arith.subf %213, %214 : vector<8x128xf32>
    %216 = math.absf %215 : vector<8x128xf32>
    %217 = arith.addf %210, %216 : vector<8x128xf32>
    %c0_93 = arith.constant 0 : index
    %c31 = arith.constant 31 : index
    %218 = vector.load %arg1[%c0_93, %c31] : memref<8x32xf32, #tpu.memory_space<vmem>>, vector<8x1xf32>
    %c31_94 = arith.constant 31 : index
    %c0_95 = arith.constant 0 : index
    %219 = vector.load %arg2[%c31_94, %c0_95] : memref<32x128xf32, #tpu.memory_space<vmem>>, vector<1x128xf32>
    %220 = vector.broadcast %218 : vector<8x1xf32> to vector<8x128xf32>
    %221 = vector.broadcast %219 : vector<1x128xf32> to vector<8x128xf32>
    %222 = arith.subf %220, %221 : vector<8x128xf32>
    %223 = math.absf %222 : vector<8x128xf32>
    %224 = arith.addf %217, %223 : vector<8x128xf32>
    %c0_96 = arith.constant 0 : index
    %c0_97 = arith.constant 0 : index
    %225 = vector.load %arg3[%c0_96, %c0_97] : memref<8x1xf32, #tpu.memory_space<vmem>>, vector<8x1xf32>
    %c0_98 = arith.constant 0 : index
    %c0_99 = arith.constant 0 : index
    %226 = vector.load %arg4[%c0_98, %c0_99] : memref<1x128xf32, #tpu.memory_space<vmem>>, vector<1x128xf32>
    %227 = vector.broadcast %225 : vector<8x1xf32> to vector<8x128xf32>
    %228 = vector.broadcast %226 : vector<1x128xf32> to vector<8x128xf32>
    %229 = arith.addf %227, %228 : vector<8x128xf32>
    %230 = arith.addf %229, %224 : vector<8x128xf32>
    %cst_100 = arith.constant 9.99999996E-13 : f32
    %231 = vector.broadcast %cst_100 : f32 to vector<8x128xf32>
    %232 = arith.maximumf %230, %231 : vector<8x128xf32>
    %233 = tpu.reciprocal %232 {approx = true} : vector<8x128xf32> -> vector<8x128xf32>
    %234 = arith.mulf %232, %233 : vector<8x128xf32>
    %cst_101 = arith.constant 2.000000e+00 : f32
    %235 = vector.broadcast %cst_101 : f32 to vector<8x128xf32>
    %236 = arith.subf %235, %234 : vector<8x128xf32>
    %237 = arith.mulf %233, %236 : vector<8x128xf32>
    %238 = arith.subf %229, %224 : vector<8x128xf32>
    %239 = arith.mulf %238, %237 : vector<8x128xf32>
    %c0_102 = arith.constant 0 : index
    %c0_103 = arith.constant 0 : index
    %240 = vector.load %arg5[%c0_102, %c0_103] : memref<8x128xf32, #tpu.memory_space<vmem>>, vector<8x128xf32>
    tpu.vector_store %arg5[%c0_102, %c0_103], %239 {strides = array<i32>} : memref<8x128xf32, #tpu.memory_space<vmem>>, vector<8x128xf32>,
    return
  }
  func.func @transform_0(%arg0: i32) -> (i32, i32) {
    %c0_i32 = arith.constant 0 : i32
    %c0_i32_0 = arith.constant 0 : i32
    %c0_i32_1 = arith.constant 0 : i32
    return %c0_i32, %c0_i32_0 : i32, i32
  }
  func.func @transform_1(%arg0: i32) -> (i32, i32) {
    %c0_i32 = arith.constant 0 : i32
    %c0_i32_0 = arith.constant 0 : i32
    return %c0_i32, %arg0 : i32, i32
  }
  func.func @transform_2(%arg0: i32) -> (i32, i32) {
    %c0_i32 = arith.constant 0 : i32
    %c0_i32_0 = arith.constant 0 : i32
    %c0_i32_1 = arith.constant 0 : i32
    return %c0_i32, %c0_i32_0 : i32, i32
  }
  func.func @transform_3(%arg0: i32) -> (i32, i32) {
    %c0_i32 = arith.constant 0 : i32
    %c0_i32_0 = arith.constant 0 : i32
    return %c0_i32, %arg0 : i32, i32
  }
  func.func @transform_4(%arg0: i32) -> (i32, i32) {
    %c0_i32 = arith.constant 0 : i32
    %c0_i32_0 = arith.constant 0 : i32
    return %c0_i32, %arg0 : i32, i32
  }
}

</mosaic_0001>

<llo_original>
// kernel: _sim_and_topk.1
$region0: #{_sim_and_topk.1}
  #allocation0 [shape = 'u32[]', space=smem, size = 0x4, offset = 0x4, fixed_abs, tag = 'smem constant byte address 0x4 - core index']
  #allocation1 [shape = 'u32[144,128]{1,0:T(1,128)}', space=vmem, size = 0x12000, scoped, tag = 'internal scratch']
  %s0 = inlined_call_operand.vmem [shape: f32[8,32], index: 0, kind: input, shape index: {}]
  %s1 = inlined_call_operand.hbm [shape: f32[32,384], index: 1, kind: input, shape index: {}]
  %s2 = inlined_call_operand.vmem [shape: f32[8,1], index: 2, kind: input, shape index: {}]
  %s3 = inlined_call_operand.vmem [shape: f32[1,384], index: 3, kind: input, shape index: {}]
  %s4 = inlined_call_operand.vmem [shape: f32[8,384], index: 4, kind: output, shape index: {}]
  %s5 = sld [smem:[#allocation0]]
  $region53: #{_sim_and_topk.1} parent=0
    _
  %s7 = ssub.s32 1, %s5
  %s8 = scalar_select 0, %s7, %s5
  $region1: #{_sim_and_topk.1} parent=0
    #allocation2 [shape = 'u8[32768]{0}', space=vmem, size = 0x8000, scoped, tag = 'input window, operand 1']
    #allocation3 [shape = 's32[2]{0}', space=sflag, size = 0x8, scoped, tag = 'scoped memory for _sim_and_topk.1']
    %9 = vsyncpa [#allocation3], 0
    %s10 = scalar_lea.sflag [#allocation3], 1
    %11 = vsyncpa %s10, 0
    loop: start=0, step=1, limit=5
    $region2: #{_sim_and_topk.1} parent=1 // loop_pre_header
      _
    $region3: #{_sim_and_topk.1} parent=1 // loop_header
      %s13 = sphi 0, %s17
      %p14 = scmp.ge.s32.totalorder %s13, 5
      %s21 = sphi 0, %s21
      %s23 = sphi 0, %s21
      %s24 = sphi 0, %s23
      %s38 = sphi 0, %s24
      %s44 = sphi 0, %s46
      %s47 = sphi 0, %s44
      %s48 = sphi 0, %s47
      %s64 = sphi 0, %s48
      %s68 = sphi 0, %s68
      %s70 = sphi 0, %s68
      %s71 = sphi 0, %s70
      %s85 = sphi 0, %s71
      %s91 = sphi 0, %s93
      %s94 = sphi 0, %s91
      %s95 = sphi 0, %s94
      %s111 = sphi 0, %s95
      %s117 = sphi 0, %s119
      %s120 = sphi 0, %s117
      %s121 = sphi 0, %s120
      %s137 = sphi 0, %s121
    $region4: #{_sim_and_topk.1} parent=1 // loop_header_branch
      %16 = sbr.rel (%p14) target = $region8
    $region5: #{_sim_and_topk.1} parent=1 // loop_body
      %s18 = ssub.s32 %s13, 1
      %s19 = ssub.s32 %s13, 2
      %s20 = sadd.s32 %s13, 1
      %s22 = sadd.s32 %s21, 1
      %p25 = scmp.eq.s32.totalorder %s13, 2
      %p26 = scmp.ne.s32.totalorder %s21, %s23
      %p27 = scmp.eq.s32.totalorder %s13, 0
      %p28 = por %p26, %p27
      %p29 = scmp.ne.s32.totalorder %s21, %s23
      %p30 = scmp.eq.s32.totalorder %s18, 2
      %p31 = por %p29, %p30
      %p32 = scmp.ne.s32.totalorder %s23, %s24
      %p33 = scmp.eq.s32.totalorder %s18, 0
      %p34 = por %p32, %p33
      %p35 = scmp.ne.s32.totalorder %s23, %s24
      %p36 = scmp.eq.s32.totalorder %s19, 2
      %p37 = por %p35, %p36
      %p39 = scmp.ne.s32.totalorder %s24, %s38
      %p40 = scmp.eq.s32.totalorder %s19, 0
      %p41 = por %p39, %p40
      %s42 = ssub.s32 %s13, %s20
      %p43 = scmp.eq.s32.totalorder %s42, 0
      %s45 = sadd.s32 %s44, 1
      %s46 = scalar_select %p43, %s44, %s45
      %p49 = pneg %p43
      %p50 = scmp.eq.s32.totalorder %s13, 2
      %p51 = por %p49, %p50
      %p52 = scmp.ne.s32.totalorder %s44, %s47
      %p53 = scmp.eq.s32.totalorder %s13, 0
      %p54 = por %p52, %p53
      %p55 = scmp.ne.s32.totalorder %s44, %s47
      %p56 = scmp.eq.s32.totalorder %s18, 2
      %p57 = por %p55, %p56
      %p58 = scmp.ne.s32.totalorder %s47, %s48
      %p59 = scmp.eq.s32.totalorder %s18, 0
      %p60 = por %p58, %p59
      %p61 = scmp.ne.s32.totalorder %s47, %s48
      %p62 = scmp.eq.s32.totalorder %s19, 2
      %p63 = por %p61, %p62
      %p65 = scmp.ne.s32.totalorder %s48, %s64
      %p66 = scmp.eq.s32.totalorder %s19, 0
      %p67 = por %p65, %p66
      %s69 = sadd.s32 %s68, 1
      %p72 = scmp.eq.s32.totalorder %s13, 2
      %p73 = scmp.ne.s32.totalorder %s68, %s70
      %p74 = scmp.eq.s32.totalorder %s13, 0
      %p75 = por %p73, %p74
      %p76 = scmp.ne.s32.totalorder %s68, %s70
      %p77 = scmp.eq.s32.totalorder %s18, 2
      %p78 = por %p76, %p77
      %p79 = scmp.ne.s32.totalorder %s70, %s71
      %p80 = scmp.eq.s32.totalorder %s18, 0
      %p81 = por %p79, %p80
      %p82 = scmp.ne.s32.totalorder %s70, %s71
      %p83 = scmp.eq.s32.totalorder %s19, 2
      %p84 = por %p82, %p83
      %p86 = scmp.ne.s32.totalorder %s71, %s85
      %p87 = scmp.eq.s32.totalorder %s19, 0
      %p88 = por %p86, %p87
      %s89 = ssub.s32 %s13, %s20
      %p90 = scmp.eq.s32.totalorder %s89, 0
      %s92 = sadd.s32 %s91, 1
      %s93 = scalar_select %p90, %s91, %s92
      %p96 = pneg %p90
      %p97 = scmp.eq.s32.totalorder %s13, 2
      %p98 = por %p96, %p97
      %p99 = scmp.ne.s32.totalorder %s91, %s94
      %p100 = scmp.eq.s32.totalorder %s13, 0
      %p101 = por %p99, %p100
      %p102 = scmp.ne.s32.totalorder %s91, %s94
      %p103 = scmp.eq.s32.totalorder %s18, 2
      %p104 = por %p102, %p103
      %p105 = scmp.ne.s32.totalorder %s94, %s95
      %p106 = scmp.eq.s32.totalorder %s18, 0
      %p107 = por %p105, %p106
      %p108 = scmp.ne.s32.totalorder %s94, %s95
      %p109 = scmp.eq.s32.totalorder %s19, 2
      %p110 = por %p108, %p109
      %p112 = scmp.ne.s32.totalorder %s95, %s111
      %p113 = scmp.eq.s32.totalorder %s19, 0
      %p114 = por %p112, %p113
      %s115 = ssub.s32 %s13, %s20
      %p116 = scmp.eq.s32.totalorder %s115, 0
      %s118 = sadd.s32 %s117, 1
      %s119 = scalar_select %p116, %s117, %s118
      %p122 = pneg %p116
      %p123 = scmp.eq.s32.totalorder %s13, 2
      %p124 = por %p122, %p123
      %p125 = scmp.ne.s32.totalorder %s117, %s120
      %p126 = scmp.eq.s32.totalorder %s13, 0
      %p127 = por %p125, %p126
      %p128 = scmp.ne.s32.totalorder %s117, %s120
      %p129 = scmp.eq.s32.totalorder %s18, 2
      %p130 = por %p128, %p129
      %p131 = scmp.ne.s32.totalorder %s120, %s121
      %p132 = scmp.eq.s32.totalorder %s18, 0
      %p133 = por %p131, %p132
      %p134 = scmp.ne.s32.totalorder %s120, %s121
      %p135 = scmp.eq.s32.totalorder %s19, 2
      %p136 = por %p134, %p135
      %p138 = scmp.ne.s32.totalorder %s121, %s137
      %p139 = scmp.eq.s32.totalorder %s19, 0
      %p140 = por %p138, %p139
      %p141 = scmp.le.s32.totalorder 1, %s13
      %p142 = scmp.lt.s32.totalorder %s13, 4
      %p143 = pnand %p141, %p142
      %p144 = pneg %p143
      // Predicated region
      $region9: #{_sim_and_topk.1} parent=5 // pred_check
        _
      $region10: #{_sim_and_topk.1} parent=5 // pred_check_branch
        %146 = sbr.rel (%p143) target = $region12
      $region11: #{_sim_and_topk.1} parent=5 // pred_region
        %s147 = ssub.s32 %s13, 1
        // Predicated region
        $region13: #{_sim_and_topk.1} parent=11 // pred_check
          %p148 = pneg %p34
        $region14: #{_sim_and_topk.1} parent=11 // pred_check_branch
          %150 = sbr.rel (%p148) target = $region16
        $region15: #{_sim_and_topk.1} parent=11 // pred_region
          _
        $region16: #{_sim_and_topk.1} parent=11 // pred_fallthru
          _
        // Predicated region
        $region17: #{_sim_and_topk.1} parent=11 // pred_check
          %p151 = pneg %p81
        $region18: #{_sim_and_topk.1} parent=11 // pred_check_branch
          %153 = sbr.rel (%p151) target = $region20
        $region19: #{_sim_and_topk.1} parent=11 // pred_region
          _
        $region20: #{_sim_and_topk.1} parent=11 // pred_fallthru
          _
      $region12: #{_sim_and_topk.1} parent=5 // pred_fallthru
        _
      %p154 = scmp.lt.s32.totalorder %s13, 3
      // Predicated region
      $region21: #{_sim_and_topk.1} parent=5 // pred_check
        %p155 = pneg %p154
      $region22: #{_sim_and_topk.1} parent=5 // pred_check_branch
        %157 = sbr.rel (%p155) target = $region24
      $region23: #{_sim_and_topk.1} parent=5 // pred_region
        // Predicated region
        $region25: #{_sim_and_topk.1} parent=23 // pred_check
          %p158 = pneg %p54
        $region26: #{_sim_and_topk.1} parent=23 // pred_check_branch
          %160 = sbr.rel (%p158) target = $region28
        $region27: #{_sim_and_topk.1} parent=23 // pred_region
          %s161 = sand.u32 %s44, 1
          %s162 = scalar_lea.sflag [#allocation3], %s161
          %s163 = sand.u32 %s44, 1
          %s164 = smul.addr %s163, 32
          %s165 = scalar_lea.vmem [#allocation2], %s164
          %s167 = ssub.s32 512, 512
          %168 = vsyncadd %s162, %s167
          %s169 = smul.addr %s13, 128
          %s170 = scalar_lea.hbm %s1, %s169
          %s171 = sshll.u32 %s165, 4
          %s172 = int_to_ptr.vmem [resolvable:$true] %s171
          %177 = dma.hbm_to_vmem [thread:$0]  %s170, 512, %s172, %s162, 384, 128, 8
        $region28: #{_sim_and_topk.1} parent=23 // pred_fallthru
          _
        // Predicated region
        $region29: #{_sim_and_topk.1} parent=23 // pred_check
          %p178 = pneg %p101
        $region30: #{_sim_and_topk.1} parent=23 // pred_check_branch
          %180 = sbr.rel (%p178) target = $region32
        $region31: #{_sim_and_topk.1} parent=23 // pred_region
          %p181 = scmp.lt.s32.totalorder %s13, 2
          %s182 = scalar_select %p181, %s13, 2
          %s183 = scalar_lea.vmem %s3, %s182
        $region32: #{_sim_and_topk.1} parent=23 // pred_fallthru
          _
      $region24: #{_sim_and_topk.1} parent=5 // pred_fallthru
        _
      %p184 = scmp.le.s32.totalorder 1, %s13
      %p185 = scmp.lt.s32.totalorder %s13, 4
      %p186 = pnand %p184, %p185
      %p187 = pneg %p186
      // Predicated region
      $region33: #{_sim_and_topk.1} parent=5 // pred_check
        _
      $region34: #{_sim_and_topk.1} parent=5 // pred_check_branch
        %189 = sbr.rel (%p186) target = $region36
      $region35: #{_sim_and_topk.1} parent=5 // pred_region
        %s190 = ssub.s32 %s13, 1
        %s191 = sand.u32 %s47, 1
        %s192 = scalar_lea.sflag [#allocation3], %s191
        %s193 = sand.u32 %s47, 1
        %s194 = smul.addr %s193, 32
        %s195 = scalar_lea.vmem [#allocation2], %s194
        // Predicated region
        $region37: #{_sim_and_topk.1} parent=35 // pred_check
          %p196 = pneg %p60
        $region38: #{_sim_and_topk.1} parent=35 // pred_check_branch
          %198 = sbr.rel (%p196) target = $region40
        $region39: #{_sim_and_topk.1} parent=35 // pred_region
          %199 = dma.done %s192, 512
        $region40: #{_sim_and_topk.1} parent=35 // pred_fallthru
          _
        %p200 = pneg %p34
        %p201 = pneg %p31
        %s202 = sand.u32 %s47, 1
        %s203 = scalar_lea.sflag [#allocation3], %s202
        %s204 = sand.u32 %s47, 1
        %s205 = smul.addr %s204, 32
        %s206 = scalar_lea.vmem [#allocation2], %s205
        %p207 = pneg %p60
        %p208 = pneg %p57
        %p209 = pneg %p81
        %p210 = pneg %p78
        %p211 = scmp.lt.s32.totalorder %s18, 2
        %s212 = scalar_select %p211, %s18, 2
        %s213 = scalar_lea.vmem %s3, %s212
        %p214 = pneg %p107
        %p215 = pneg %p104
        %p216 = pneg %p133
        %p217 = pneg %p130
        %p218 = scmp.lt.s32.totalorder %s18, 2
        %s219 = scalar_select %p218, %s18, 2
        %s220 = smul.addr %s219, 8
        %s221 = scalar_lea.vmem %s4, %s220
        %p222 = scmp.lt.s32.totalorder %s18, 2
        %s223 = scalar_select %p222, %s18, 2
        %s224 = scalar_lea.vmem %s3, %s223
        %p225 = scmp.lt.s32.totalorder %s18, 2
        %s226 = scalar_select %p225, %s18, 2
        %s227 = smul.addr %s226, 8
        %s228 = scalar_lea.vmem %s4, %s227
        %v229 = vld [vmem:[%s0] sm:$0xff]
        %v230 = vld [vmem:[%s195] sm:$0x1]
        %232 = vset.pattern.permute.xlu0 0
        %233 = vperm.xlu0 %232, %v229
        %v234 = vpop.permute.xlu0 %233
        %v236 = vlaneseq
        %v237 = vshrl.u32 %v236, 7
        %v238 = vsub.s32 0, %v237
        %v239 = vrot.slane %v230, %v238
        %v240 = vsub.f32 %v234, %v239
        %v241 = vand.u32 2147483647, %v240
        %v242 = vadd.f32 %v241, 0.0
        %v243 = vld [vmem:[%s195 + $0x1] sm:$0x1]
        %244 = vset.pattern.permute.xlu0 1
        %245 = vperm.xlu0 %244, %v229
        %v246 = vpop.permute.xlu0 %245
        %v248 = vlaneseq
        %v249 = vshrl.u32 %v248, 7
        %v250 = vsub.s32 0, %v249
        %v251 = vrot.slane %v243, %v250
        %v252 = vsub.f32 %v246, %v251
        %v253 = vand.u32 2147483647, %v252
        %v254 = vadd.f32 %v242, %v253
        %v255 = vld [vmem:[%s195 + $0x2] sm:$0x1]
        %256 = vset.pattern.permute.xlu0 2
        %257 = vperm.xlu0 %256, %v229
        %v258 = vpop.permute.xlu0 %257
        %v260 = vlaneseq
        %v261 = vshrl.u32 %v260, 7
        %v262 = vsub.s32 0, %v261
        %v263 = vrot.slane %v255, %v262
        %v264 = vsub.f32 %v258, %v263
        %v265 = vand.u32 2147483647, %v264
        %v266 = vadd.f32 %v254, %v265
        %v267 = vld [vmem:[%s195 + $0x3] sm:$0x1]
        %268 = vset.pattern.permute.xlu0 3
        %269 = vperm.xlu0 %268, %v229
        %v270 = vpop.permute.xlu0 %269
        %v272 = vlaneseq
        %v273 = vshrl.u32 %v272, 7
        %v274 = vsub.s32 0, %v273
        %v275 = vrot.slane %v267, %v274
        %v276 = vsub.f32 %v270, %v275
        %v277 = vand.u32 2147483647, %v276
        %v278 = vadd.f32 %v266, %v277
        %v279 = vld [vmem:[%s195 + $0x4] sm:$0x1]
        %280 = vset.pattern.permute.xlu0 4
        %281 = vperm.xlu0 %280, %v229
        %v282 = vpop.permute.xlu0 %281
        %v284 = vlaneseq
        %v285 = vshrl.u32 %v284, 7
        %v286 = vsub.s32 0, %v285
        %v287 = vrot.slane %v279, %v286
        %v288 = vsub.f32 %v282, %v287
        %v289 = vand.u32 2147483647, %v288
        %v290 = vadd.f32 %v278, %v289
        %v291 = vld [vmem:[%s195 + $0x5] sm:$0x1]
        %292 = vset.pattern.permute.xlu0 5
        %293 = vperm.xlu0 %292, %v229
        %v294 = vpop.permute.xlu0 %293
        %v296 = vlaneseq
        %v297 = vshrl.u32 %v296, 7
        %v298 = vsub.s32 0, %v297
        %v299 = vrot.slane %v291, %v298
        %v300 = vsub.f32 %v294, %v299
        %v301 = vand.u32 2147483647, %v300
        %v302 = vadd.f32 %v290, %v301
        %v303 = vld [vmem:[%s195 + $0x6] sm:$0x1]
        %304 = vset.pattern.permute.xlu0 6
        %305 = vperm.xlu0 %304, %v229
        %v306 = vpop.permute.xlu0 %305
        %v308 = vlaneseq
        %v309 = vshrl.u32 %v308, 7
        %v310 = vsub.s32 0, %v309
        %v311 = vrot.slane %v303, %v310
        %v312 = vsub.f32 %v306, %v311
        %v313 = vand.u32 2147483647, %v312
        %v314 = vadd.f32 %v302, %v313
        %v315 = vld [vmem:[%s195 + $0x7] sm:$0x1]
        %316 = vset.pattern.permute.xlu0 7
        %317 = vperm.xlu0 %316, %v229
        %v318 = vpop.permute.xlu0 %317
        %v320 = vlaneseq
        %v321 = vshrl.u32 %v320, 7
        %v322 = vsub.s32 0, %v321
        %v323 = vrot.slane %v315, %v322
        %v324 = vsub.f32 %v318, %v323
        %v325 = vand.u32 2147483647, %v324
        %v326 = vadd.f32 %v314, %v325
        %v327 = vld [vmem:[%s195 + $0x8] sm:$0x1]
        %328 = vset.pattern.permute.xlu0 8
        %329 = vperm.xlu0 %328, %v229
        %v330 = vpop.permute.xlu0 %329
        %v332 = vlaneseq
        %v333 = vshrl.u32 %v332, 7
        %v334 = vsub.s32 0, %v333
        %v335 = vrot.slane %v327, %v334
        %v336 = vsub.f32 %v330, %v335
        %v337 = vand.u32 2147483647, %v336
        %v338 = vadd.f32 %v326, %v337
        %v339 = vld [vmem:[%s195 + $0x9] sm:$0x1]
        %340 = vset.pattern.permute.xlu0 9
        %341 = vperm.xlu0 %340, %v229
        %v342 = vpop.permute.xlu0 %341
        %v344 = vlaneseq
        %v345 = vshrl.u32 %v344, 7
        %v346 = vsub.s32 0, %v345
        %v347 = vrot.slane %v339, %v346
        %v348 = vsub.f32 %v342, %v347
        %v349 = vand.u32 2147483647, %v348
        %v350 = vadd.f32 %v338, %v349
        %v351 = vld [vmem:[%s195 + $0xa] sm:$0x1]
        %352 = vset.pattern.permute.xlu0 10
        %353 = vperm.xlu0 %352, %v229
        %v354 = vpop.permute.xlu0 %353
        %v356 = vlaneseq
        %v357 = vshrl.u32 %v356, 7
        %v358 = vsub.s32 0, %v357
        %v359 = vrot.slane %v351, %v358
        %v360 = vsub.f32 %v354, %v359
        %v361 = vand.u32 2147483647, %v360
        %v362 = vadd.f32 %v350, %v361
        %v363 = vld [vmem:[%s195 + $0xb] sm:$0x1]
        %364 = vset.pattern.permute.xlu0 11
        %365 = vperm.xlu0 %364, %v229
        %v366 = vpop.permute.xlu0 %365
        %v368 = vlaneseq
        %v369 = vshrl.u32 %v368, 7
        %v370 = vsub.s32 0, %v369
        %v371 = vrot.slane %v363, %v370
        %v372 = vsub.f32 %v366, %v371
        %v373 = vand.u32 2147483647, %v372
        %v374 = vadd.f32 %v362, %v373
        %v375 = vld [vmem:[%s195 + $0xc] sm:$0x1]
        %376 = vset.pattern.permute.xlu0 12
        %377 = vperm.xlu0 %376, %v229
        %v378 = vpop.permute.xlu0 %377
        %v380 = vlaneseq
        %v381 = vshrl.u32 %v380, 7
        %v382 = vsub.s32 0, %v381
        %v383 = vrot.slane %v375, %v382
        %v384 = vsub.f32 %v378, %v383
        %v385 = vand.u32 2147483647, %v384
        %v386 = vadd.f32 %v374, %v385
        %v387 = vld [vmem:[%s195 + $0xd] sm:$0x1]
        %388 = vset.pattern.permute.xlu0 13
        %389 = vperm.xlu0 %388, %v229
        %v390 = vpop.permute.xlu0 %389
        %v392 = vlaneseq
        %v393 = vshrl.u32 %v392, 7
        %v394 = vsub.s32 0, %v393
        %v395 = vrot.slane %v387, %v394
        %v396 = vsub.f32 %v390, %v395
        %v397 = vand.u32 2147483647, %v396
        %v398 = vadd.f32 %v386, %v397
        %v399 = vld [vmem:[%s195 + $0xe] sm:$0x1]
        %400 = vset.pattern.permute.xlu0 14
        %401 = vperm.xlu0 %400, %v229
        %v402 = vpop.permute.xlu0 %401
        %v404 = vlaneseq
        %v405 = vshrl.u32 %v404, 7
        %v406 = vsub.s32 0, %v405
        %v407 = vrot.slane %v399, %v406
        %v408 = vsub.f32 %v402, %v407
        %v409 = vand.u32 2147483647, %v408
        %v410 = vadd.f32 %v398, %v409
        %v411 = vld [vmem:[%s195 + $0xf] sm:$0x1]
        %412 = vset.pattern.permute.xlu0 15
        %413 = vperm.xlu0 %412, %v229
        %v414 = vpop.permute.xlu0 %413
        %v416 = vlaneseq
        %v417 = vshrl.u32 %v416, 7
        %v418 = vsub.s32 0, %v417
        %v419 = vrot.slane %v411, %v418
        %v420 = vsub.f32 %v414, %v419
        %v421 = vand.u32 2147483647, %v420
        %v422 = vadd.f32 %v410, %v421
        %v423 = vld [vmem:[%s195 + $0x10] sm:$0x1]
        %424 = vset.pattern.permute.xlu0 16
        %425 = vperm.xlu0 %424, %v229
        %v426 = vpop.permute.xlu0 %425
        %v428 = vlaneseq
        %v429 = vshrl.u32 %v428, 7
        %v430 = vsub.s32 0, %v429
        %v431 = vrot.slane %v423, %v430
        %v432 = vsub.f32 %v426, %v431
        %v433 = vand.u32 2147483647, %v432
        %v434 = vadd.f32 %v422, %v433
        %v435 = vld [vmem:[%s195 + $0x11] sm:$0x1]
        %436 = vset.pattern.permute.xlu0 17
        %437 = vperm.xlu0 %436, %v229
        %v438 = vpop.permute.xlu0 %437
        %v440 = vlaneseq
        %v441 = vshrl.u32 %v440, 7
        %v442 = vsub.s32 0, %v441
        %v443 = vrot.slane %v435, %v442
        %v444 = vsub.f32 %v438, %v443
        %v445 = vand.u32 2147483647, %v444
        %v446 = vadd.f32 %v434, %v445
        %v447 = vld [vmem:[%s195 + $0x12] sm:$0x1]
        %448 = vset.pattern.permute.xlu0 18
        %449 = vperm.xlu0 %448, %v229
        %v450 = vpop.permute.xlu0 %449
        %v452 = vlaneseq
        %v453 = vshrl.u32 %v452, 7
        %v454 = vsub.s32 0, %v453
        %v455 = vrot.slane %v447, %v454
        %v456 = vsub.f32 %v450, %v455
        %v457 = vand.u32 2147483647, %v456
        %v458 = vadd.f32 %v446, %v457
        %v459 = vld [vmem:[%s195 + $0x13] sm:$0x1]
        %460 = vset.pattern.permute.xlu0 19
        %461 = vperm.xlu0 %460, %v229
        %v462 = vpop.permute.xlu0 %461
        %v464 = vlaneseq
        %v465 = vshrl.u32 %v464, 7
        %v466 = vsub.s32 0, %v465
        %v467 = vrot.slane %v459, %v466
        %v468 = vsub.f32 %v462, %v467
        %v469 = vand.u32 2147483647, %v468
        %v470 = vadd.f32 %v458, %v469
        %v471 = vld [vmem:[%s195 + $0x14] sm:$0x1]
        %472 = vset.pattern.permute.xlu0 20
        %473 = vperm.xlu0 %472, %v229
        %v474 = vpop.permute.xlu0 %473
        %v476 = vlaneseq
        %v477 = vshrl.u32 %v476, 7
        %v478 = vsub.s32 0, %v477
        %v479 = vrot.slane %v471, %v478
        %v480 = vsub.f32 %v474, %v479
        %v481 = vand.u32 2147483647, %v480
        %v482 = vadd.f32 %v470, %v481
        %v483 = vld [vmem:[%s195 + $0x15] sm:$0x1]
        %484 = vset.pattern.permute.xlu0 21
        %485 = vperm.xlu0 %484, %v229
        %v486 = vpop.permute.xlu0 %485
        %v488 = vlaneseq
        %v489 = vshrl.u32 %v488, 7
        %v490 = vsub.s32 0, %v489
        %v491 = vrot.slane %v483, %v490
        %v492 = vsub.f32 %v486, %v491
        %v493 = vand.u32 2147483647, %v492
        %v494 = vadd.f32 %v482, %v493
        %v495 = vld [vmem:[%s195 + $0x16] sm:$0x1]
        %496 = vset.pattern.permute.xlu0 22
        %497 = vperm.xlu0 %496, %v229
        %v498 = vpop.permute.xlu0 %497
        %v500 = vlaneseq
        %v501 = vshrl.u32 %v500, 7
        %v502 = vsub.s32 0, %v501
        %v503 = vrot.slane %v495, %v502
        %v504 = vsub.f32 %v498, %v503
        %v505 = vand.u32 2147483647, %v504
        %v506 = vadd.f32 %v494, %v505
        %v507 = vld [vmem:[%s195 + $0x17] sm:$0x1]
        %508 = vset.pattern.permute.xlu0 23
        %509 = vperm.xlu0 %508, %v229
        %v510 = vpop.permute.xlu0 %509
        %v512 = vlaneseq
        %v513 = vshrl.u32 %v512, 7
        %v514 = vsub.s32 0, %v513
        %v515 = vrot.slane %v507, %v514
        %v516 = vsub.f32 %v510, %v515
        %v517 = vand.u32 2147483647, %v516
        %v518 = vadd.f32 %v506, %v517
        %v519 = vld [vmem:[%s195 + $0x18] sm:$0x1]
        %520 = vset.pattern.permute.xlu0 24
        %521 = vperm.xlu0 %520, %v229
        %v522 = vpop.permute.xlu0 %521
        %v524 = vlaneseq
        %v525 = vshrl.u32 %v524, 7
        %v526 = vsub.s32 0, %v525
        %v527 = vrot.slane %v519, %v526
        %v528 = vsub.f32 %v522, %v527
        %v529 = vand.u32 2147483647, %v528
        %v530 = vadd.f32 %v518, %v529
        %v531 = vld [vmem:[%s195 + $0x19] sm:$0x1]
        %532 = vset.pattern.permute.xlu0 25
        %533 = vperm.xlu0 %532, %v229
        %v534 = vpop.permute.xlu0 %533
        %v536 = vlaneseq
        %v537 = vshrl.u32 %v536, 7
        %v538 = vsub.s32 0, %v537
        %v539 = vrot.slane %v531, %v538
        %v540 = vsub.f32 %v534, %v539
        %v541 = vand.u32 2147483647, %v540
        %v542 = vadd.f32 %v530, %v541
        %v543 = vld [vmem:[%s195 + $0x1a] sm:$0x1]
        %544 = vset.pattern.permute.xlu0 26
        %545 = vperm.xlu0 %544, %v229
        %v546 = vpop.permute.xlu0 %545
        %v548 = vlaneseq
        %v549 = vshrl.u32 %v548, 7
        %v550 = vsub.s32 0, %v549
        %v551 = vrot.slane %v543, %v550
        %v552 = vsub.f32 %v546, %v551
        %v553 = vand.u32 2147483647, %v552
        %v554 = vadd.f32 %v542, %v553
        %v555 = vld [vmem:[%s195 + $0x1b] sm:$0x1]
        %556 = vset.pattern.permute.xlu0 27
        %557 = vperm.xlu0 %556, %v229
        %v558 = vpop.permute.xlu0 %557
        %v560 = vlaneseq
        %v561 = vshrl.u32 %v560, 7
        %v562 = vsub.s32 0, %v561
        %v563 = vrot.slane %v555, %v562
        %v564 = vsub.f32 %v558, %v563
        %v565 = vand.u32 2147483647, %v564
        %v566 = vadd.f32 %v554, %v565
        %v567 = vld [vmem:[%s195 + $0x1c] sm:$0x1]
        %568 = vset.pattern.permute.xlu0 28
        %569 = vperm.xlu0 %568, %v229
        %v570 = vpop.permute.xlu0 %569
        %v572 = vlaneseq
        %v573 = vshrl.u32 %v572, 7
        %v574 = vsub.s32 0, %v573
        %v575 = vrot.slane %v567, %v574
        %v576 = vsub.f32 %v570, %v575
        %v577 = vand.u32 2147483647, %v576
        %v578 = vadd.f32 %v566, %v577
        %v579 = vld [vmem:[%s195 + $0x1d] sm:$0x1]
        %580 = vset.pattern.permute.xlu0 29
        %581 = vperm.xlu0 %580, %v229
        %v582 = vpop.permute.xlu0 %581
        %v584 = vlaneseq
        %v585 = vshrl.u32 %v584, 7
        %v586 = vsub.s32 0, %v585
        %v587 = vrot.slane %v579, %v586
        %v588 = vsub.f32 %v582, %v587
        %v589 = vand.u32 2147483647, %v588
        %v590 = vadd.f32 %v578, %v589
        %v591 = vld [vmem:[%s195 + $0x1e] sm:$0x1]
        %592 = vset.pattern.permute.xlu0 30
        %593 = vperm.xlu0 %592, %v229
        %v594 = vpop.permute.xlu0 %593
        %v596 = vlaneseq
        %v597 = vshrl.u32 %v596, 7
        %v598 = vsub.s32 0, %v597
        %v599 = vrot.slane %v591, %v598
        %v600 = vsub.f32 %v594, %v599
        %v601 = vand.u32 2147483647, %v600
        %v602 = vadd.f32 %v590, %v601
        %v603 = vld [vmem:[%s195 + $0x1f] sm:$0x1]
        %604 = vset.pattern.permute.xlu0 31
        %605 = vperm.xlu0 %604, %v229
        %v606 = vpop.permute.xlu0 %605
        %v608 = vlaneseq
        %v609 = vshrl.u32 %v608, 7
        %v610 = vsub.s32 0, %v609
        %v611 = vrot.slane %v603, %v610
        %v612 = vsub.f32 %v606, %v611
        %v613 = vand.u32 2147483647, %v612
        %v614 = vadd.f32 %v602, %v613
        %v615 = vld [vmem:[%s2] sm:$0xff]
        %v616 = vld [vmem:[%s224] sm:$0x1]
        %618 = vset.pattern.permute.xlu0 0
        %619 = vperm.xlu0 %618, %v615
        %v620 = vpop.permute.xlu0 %619
        %v623 = vlaneseq
        %v624 = vshrl.u32 %v623, 7
        %v625 = vsub.s32 0, %v624
        %v626 = vrot.slane %v616, %v625
        %v628 = vadd.f32 %v620, %v626
        %v629 = vadd.f32 %v628, %v614
        %v630 = vmax.f32 %v629, 1e-12
        %v631 = vrcp.pop %v630
        %v632 = vmul.f32 %v630, %v631
        %v633 = vsub.f32 2.0, %v632
        %v634 = vmul.f32 %v631, %v633
        %v635 = vsub.f32 %v628, %v614
        %v636 = vmul.f32 %v635, %v634
        %637 = vst [vmem:[%s228] sm:$0xff] %v636
        %p638 = scmp.lt.s32.totalorder %s18, 2
        %s639 = scalar_select %p638, %s18, 2
        %s640 = smul.addr %s639, 8
        %s641 = scalar_lea.vmem %s4, %s640
        // Predicated region
        $region41: #{_sim_and_topk.1} parent=35 // pred_check
          %p642 = pneg %p130
        $region42: #{_sim_and_topk.1} parent=35 // pred_check_branch
          %644 = sbr.rel (%p642) target = $region44
        $region43: #{_sim_and_topk.1} parent=35 // pred_region
          _
        $region44: #{_sim_and_topk.1} parent=35 // pred_fallthru
          _
      $region36: #{_sim_and_topk.1} parent=5 // pred_fallthru
        _
      %p645 = scmp.le.s32.totalorder 2, %s13
      // Predicated region
      $region45: #{_sim_and_topk.1} parent=5 // pred_check
        %p646 = pneg %p645
      $region46: #{_sim_and_topk.1} parent=5 // pred_check_branch
        %648 = sbr.rel (%p646) target = $region48
      $region47: #{_sim_and_topk.1} parent=5 // pred_region
        %s649 = ssub.s32 %s13, 2
        // Predicated region
        $region49: #{_sim_and_topk.1} parent=47 // pred_check
          %p650 = pneg %p136
        $region50: #{_sim_and_topk.1} parent=47 // pred_check_branch
          %652 = sbr.rel (%p650) target = $region52
        $region51: #{_sim_and_topk.1} parent=47 // pred_region
          %p653 = scmp.lt.s32.totalorder %s19, 2
          %s654 = scalar_select %p653, %s19, 2
          %s655 = smul.addr %s654, 8
          %s656 = scalar_lea.vmem %s4, %s655
        $region52: #{_sim_and_topk.1} parent=47 // pred_fallthru
          _
      $region48: #{_sim_and_topk.1} parent=5 // pred_fallthru
        _
    $region6: #{_sim_and_topk.1} parent=1 // loop_footer
      %s17 = sadd.s32 1, %s13
    $region7: #{_sim_and_topk.1} parent=1 // loop_footer_branch
      %12 = sbr.rel target = $region3
    $region8: #{_sim_and_topk.1} parent=1 // loop_exit
      _
    %657 = vsyncpa [#allocation3], 1
    %s658 = scalar_lea.sflag [#allocation3], 1
    %659 = vsyncpa %s658, 1

</llo_original>
